<compile_context>
chip_gen: v6e
topology: v6e:2x2x1
jax: 0.10.0
libtpu: 0.0.40
codegen_flags: <defaults>
</compile_context>

<pallas_src>
import jax
import jax.numpy as jnp
from jax.experimental import pallas as pl
from jax.experimental.pallas import tpu as pltpu

IN = 8        # observation dim
H1 = 256
H2 = 256
NOUT = 4      # action-value dim
FOUT = 8      # fc3 output padded 4 -> 8 on sublanes (one f32 sublane tile)


def _round_up(n, m):
    return ((n + m - 1) // m) * m


def mlp_kernel(xT_ref, w1_ref, b1_ref, w2_ref, b2_ref, w3_ref, b3_ref, oT_ref):
    """One batch tile of the fused 3-layer MLP, feature-major.

    xT_ref: (8, bt) f32 (cast to bf16 in-kernel); weights bf16 in PyTorch
    (out, in) layout; biases f32 as (out, 1); oT_ref: (8, bt) f32.
    """
    xT = xT_ref[...].astype(jnp.bfloat16)                               # (8, bt)

    h1 = jnp.dot(w1_ref[...], xT, preferred_element_type=jnp.float32)   # (256, bt)
    h1 = jnp.maximum(h1 + b1_ref[...], 0.0)

    h2 = jnp.dot(w2_ref[...], h1.astype(jnp.bfloat16),
                 preferred_element_type=jnp.float32)                    # (256, bt)
    h2 = jnp.maximum(h2 + b2_ref[...], 0.0)

    out = jnp.dot(w3_ref[...], h2.astype(jnp.bfloat16),
                  preferred_element_type=jnp.float32)                   # (8, bt)
    oT_ref[...] = (out + b3_ref[...]).astype(oT_ref.dtype)


def prepare_params(params):
    """One-time prep: bf16 weights (PyTorch (out,in) layout), f32 (out,1) biases,
    fc3 zero-padded from 4 to 8 output rows (sublane padding)."""
    w3p = jnp.zeros((FOUT, H2), jnp.bfloat16)
    w3p = w3p.at[:NOUT].set(params["w3"].astype(jnp.bfloat16))
    b3p = jnp.zeros((FOUT, 1), jnp.float32)
    b3p = b3p.at[:NOUT, 0].set(params["b3"].astype(jnp.float32))
    return dict(
        w1=params["w1"].astype(jnp.bfloat16),                 # (256, 8)
        b1=params["b1"].reshape(H1, 1).astype(jnp.float32),   # (256, 1)
        w2=params["w2"].astype(jnp.bfloat16),                 # (256, 256)
        b2=params["b2"].reshape(H2, 1).astype(jnp.float32),   # (256, 1)
        w3=w3p,                                               # (8, 256)
        b3=b3p,                                               # (8, 1)
    )


def _choose_tile(B):
    """Batch-tile selection. Single un-padded step for B <= 1024 (latency path);
    otherwise lane-aligned tiles capped at 2048 with >= 2 grid steps so the
    'parallel' batch axis shards across v7x's two TensorCores."""
    if B <= 1024:
        return B, B
    bt = min(2048, _round_up(pl.cdiv(B, 2), 128))
    return bt, _round_up(B, bt)


def net_forward(x, prep):
    """x: (B, 8) float32. prep: output of prepare_params. Returns (B, 4) float32."""
    B = x.shape[0]
    bt, Bp = _choose_tile(B)

    xT = x.T                                     # (8, B) f32; cast happens in-kernel
    if Bp != B:
        xT = jnp.pad(xT, ((0, 0), (0, Bp - B)))  # zero batch-padding (sliced off below)

    grid = (Bp // bt,)
    flops = 2 * Bp * (IN * H1 + H1 * H2 + H2 * FOUT)
    bytes_accessed = (
        IN * Bp * 4 + FOUT * Bp * 4                     # x in, out
        + (H1 * IN + H2 * H1 + FOUT * H2) * 2           # bf16 weights (resident)
        + (H1 + H2 + FOUT) * 4                          # f32 biases
    )

    outT = pl.pallas_call(
        mlp_kernel,
        out_shape=jax.ShapeDtypeStruct((FOUT, Bp), jnp.float32),
        grid=grid,
        in_specs=[
            pl.BlockSpec((IN, bt), lambda i: (0, i)),     # x tile: pipelined, lane-dense
            pl.BlockSpec((H1, IN), lambda i: (0, 0)),     # weights/biases: VMEM-resident
            pl.BlockSpec((H1, 1), lambda i: (0, 0)),      #   (constant index_map => fetched once)
            pl.BlockSpec((H2, H1), lambda i: (0, 0)),
            pl.BlockSpec((H2, 1), lambda i: (0, 0)),
            pl.BlockSpec((FOUT, H2), lambda i: (0, 0)),
            pl.BlockSpec((FOUT, 1), lambda i: (0, 0)),
        ],
        out_specs=pl.BlockSpec((FOUT, bt), lambda i: (0, i)),  # lane-dense 32 B/row store
        compiler_params=pltpu.CompilerParams(
            dimension_semantics=("parallel",)),                # shard batch across TCs (v7x)
        cost_estimate=pl.CostEstimate(
            flops=flops, transcendentals=0, bytes_accessed=bytes_accessed),
    )(xT, prep["w1"], prep["b1"], prep["w2"], prep["b2"], prep["w3"], prep["b3"])

    return outT[:NOUT, :B].T                      # (B, 4); drops sublane/batch padding


def init_params(key):
    """Deterministic init mimicking torch.nn.Linear default (uniform +/- 1/sqrt(fan_in)),
    weights in PyTorch (out_features, in_features) layout."""
    def linear(key, fan_in, fan_out):
        kw, kb = jax.random.split(key)
        bound = fan_in ** -0.5
        w = jax.random.uniform(kw, (fan_out, fan_in), jnp.float32, -bound, bound)
        b = jax.random.uniform(kb, (fan_out,), jnp.float32, -bound, bound)
        return w, b

    k1, k2, k3 = jax.random.split(key, 3)
    w1, b1 = linear(k1, IN, H1)
    w2, b2 = linear(k2, H1, H2)
    w3, b3 = linear(k3, H2, NOUT)
    return dict(w1=w1, b1=b1, w2=w2, b2=b2, w3=w3, b3=b3)


def reference_forward(x, prep):
    """Pure-JAX reference using the same bf16-in / f32-accumulate numerics."""
    xT = x.T.astype(jnp.bfloat16)
    h1 = jnp.dot(prep["w1"], xT, preferred_element_type=jnp.float32) + prep["b1"]
    h1 = jnp.maximum(h1, 0.0)
    h2 = jnp.dot(prep["w2"], h1.astype(jnp.bfloat16),
                 preferred_element_type=jnp.float32) + prep["b2"]
    h2 = jnp.maximum(h2, 0.0)
    out = jnp.dot(prep["w3"], h2.astype(jnp.bfloat16),
                  preferred_element_type=jnp.float32) + prep["b3"]
    return out[:NOUT].T


def reference_forward_f32(x, params):
    """Full-precision reference matching the original torch module's numerics."""
    h1 = jnp.maximum(x @ params["w1"].T + params["b1"], 0.0)
    h2 = jnp.maximum(h1 @ params["w2"].T + params["b2"], 0.0)
    return h2 @ params["w3"].T + params["b3"]


if __name__ == "__main__":
    key = jax.random.PRNGKey(0)
    kx, kp = jax.random.split(key)

    params = init_params(kp)
    prep = prepare_params(params)
    fwd = jax.jit(net_forward)

    # Small DDQN minibatch (acting / training path): single grid step, no padding.
    B = 32
    x = jax.random.normal(kx, (B, IN), jnp.float32)
    out = jax.block_until_ready(fwd(x, prep))
    ref = reference_forward(x, prep)
    assert out.shape == (B, NOUT), out.shape
    assert jnp.allclose(out, ref, atol=2e-3, rtol=2e-3), "mismatch vs bf16 reference"
    # Fidelity vs the true f32 torch-style Net (bf16 weights => loose tolerance).
    ref32 = reference_forward_f32(x, params)
    assert jnp.allclose(out, ref32, atol=2e-1, rtol=2e-1), "mismatch vs f32 reference"

    # Larger batch (replay-buffer scoring path): exercises the tiled, 2-step grid.
    B2 = 1280
    x2 = jax.random.normal(kx, (B2, IN), jnp.float32)
    out2 = jax.block_until_ready(fwd(x2, prep))
    ref2 = reference_forward(x2, prep)
    assert out2.shape == (B2, NOUT), out2.shape
    assert jnp.allclose(out2, ref2, atol=2e-3, rtol=2e-3), "mismatch vs bf16 reference (tiled)"

    print("KERNEL_OK")
</pallas_src>

<mosaic_0001>
module attributes {stable_mosaic.version = 11 : i64} {
  func.func @mlp_kernel(%arg0: i32, %arg1: memref<8x32xf32, #tpu.memory_space<vmem>>, %arg2: memref<256x8xbf16, #tpu.memory_space<vmem>>, %arg3: memref<256x1xf32, #tpu.memory_space<vmem>>, %arg4: memref<256x256xbf16, #tpu.memory_space<vmem>>, %arg5: memref<256x1xf32, #tpu.memory_space<vmem>>, %arg6: memref<8x256xbf16, #tpu.memory_space<vmem>>, %arg7: memref<8x1xf32, #tpu.memory_space<vmem>>, %arg8: memref<8x32xf32, #tpu.memory_space<vmem>>) attributes {dimension_semantics = [#tpu.dimension_semantics<parallel>], iteration_bounds = array<i64: 1>, scalar_prefetch = 0 : i64, scratch_operands = 0 : i64, tpu.core_type = #tpu.core_type<tc>, window_params = [{transform_indices = @transform_0, window_bounds = array<i64: 8, 32>}, {pipeline_mode = #tpu.pipeline_mode<synchronous>, transform_indices = @transform_1, window_bounds = array<i64: 256, 8>}, {pipeline_mode = #tpu.pipeline_mode<synchronous>, transform_indices = @transform_2, window_bounds = array<i64: 256, 1>}, {pipeline_mode = #tpu.pipeline_mode<synchronous>, transform_indices = @transform_3, window_bounds = array<i64: 256, 256>}, {pipeline_mode = #tpu.pipeline_mode<synchronous>, transform_indices = @transform_4, window_bounds = array<i64: 256, 1>}, {pipeline_mode = #tpu.pipeline_mode<synchronous>, transform_indices = @transform_5, window_bounds = array<i64: 8, 256>}, {pipeline_mode = #tpu.pipeline_mode<synchronous>, transform_indices = @transform_6, window_bounds = array<i64: 8, 1>}, {transform_indices = @transform_7, window_bounds = array<i64: 8, 32>}]} {
    %c0 = arith.constant 0 : index
    %c0_0 = arith.constant 0 : index
    %0 = vector.load %arg1[%c0, %c0_0] : memref<8x32xf32, #tpu.memory_space<vmem>>, vector<8x32xf32>
    %1 = arith.truncf %0 : vector<8x32xf32> to vector<8x32xbf16>
    %c0_1 = arith.constant 0 : index
    %c0_2 = arith.constant 0 : index
    %2 = vector.load %arg2[%c0_1, %c0_2] : memref<256x8xbf16, #tpu.memory_space<vmem>>, vector<256x8xbf16>
    %cst = arith.constant dense<0.000000e+00> : vector<256x32xf32>
    %3 = tpu.matmul %2, %1, %cst {dimension_numbers = #tpu.dot_dimension_numbers<[1], [0], [0], [1], [0, 0, 1, 1], [], []>} : vector<256x8xbf16>, vector<8x32xbf16>, vector<256x32xf32> -> vector<256x32xf32>
    %c0_3 = arith.constant 0 : index
    %c0_4 = arith.constant 0 : index
    %4 = vector.load %arg3[%c0_3, %c0_4] : memref<256x1xf32, #tpu.memory_space<vmem>>, vector<256x1xf32>
    %5 = vector.broadcast %4 : vector<256x1xf32> to vector<256x32xf32>
    %6 = arith.addf %3, %5 : vector<256x32xf32>
    %cst_5 = arith.constant 0.000000e+00 : f32
    %7 = vector.broadcast %cst_5 : f32 to vector<256x32xf32>
    %8 = arith.maximumf %6, %7 : vector<256x32xf32>
    %c0_6 = arith.constant 0 : index
    %c0_7 = arith.constant 0 : index
    %9 = vector.load %arg4[%c0_6, %c0_7] : memref<256x256xbf16, #tpu.memory_space<vmem>>, vector<256x256xbf16>
    %10 = arith.truncf %8 : vector<256x32xf32> to vector<256x32xbf16>
    %cst_8 = arith.constant dense<0.000000e+00> : vector<256x32xf32>
    %11 = tpu.matmul %9, %10, %cst_8 {dimension_numbers = #tpu.dot_dimension_numbers<[1], [0], [0], [1], [0, 0, 1, 1], [], []>} : vector<256x256xbf16>, vector<256x32xbf16>, vector<256x32xf32> -> vector<256x32xf32>
    %c0_9 = arith.constant 0 : index
    %c0_10 = arith.constant 0 : index
    %12 = vector.load %arg5[%c0_9, %c0_10] : memref<256x1xf32, #tpu.memory_space<vmem>>, vector<256x1xf32>
    %13 = vector.broadcast %12 : vector<256x1xf32> to vector<256x32xf32>
    %14 = arith.addf %11, %13 : vector<256x32xf32>
    %cst_11 = arith.constant 0.000000e+00 : f32
    %15 = vector.broadcast %cst_11 : f32 to vector<256x32xf32>
    %16 = arith.maximumf %14, %15 : vector<256x32xf32>
    %c0_12 = arith.constant 0 : index
    %c0_13 = arith.constant 0 : index
    %17 = vector.load %arg6[%c0_12, %c0_13] : memref<8x256xbf16, #tpu.memory_space<vmem>>, vector<8x256xbf16>
    %18 = arith.truncf %16 : vector<256x32xf32> to vector<256x32xbf16>
    %cst_14 = arith.constant dense<0.000000e+00> : vector<8x32xf32>
    %19 = tpu.matmul %17, %18, %cst_14 {dimension_numbers = #tpu.dot_dimension_numbers<[1], [0], [0], [1], [0, 0, 1, 1], [], []>} : vector<8x256xbf16>, vector<256x32xbf16>, vector<8x32xf32> -> vector<8x32xf32>
    %c0_15 = arith.constant 0 : index
    %c0_16 = arith.constant 0 : index
    %20 = vector.load %arg7[%c0_15, %c0_16] : memref<8x1xf32, #tpu.memory_space<vmem>>, vector<8x1xf32>
    %21 = vector.broadcast %20 : vector<8x1xf32> to vector<8x32xf32>
    %22 = arith.addf %19, %21 : vector<8x32xf32>
    %c0_17 = arith.constant 0 : index
    %c0_18 = arith.constant 0 : index
    %23 = vector.load %arg8[%c0_17, %c0_18] : memref<8x32xf32, #tpu.memory_space<vmem>>, vector<8x32xf32>
    tpu.vector_store %arg8[%c0_17, %c0_18], %22 {strides = array<i32>} : memref<8x32xf32, #tpu.memory_space<vmem>>, vector<8x32xf32>,
    return
  }
  func.func @transform_0(%arg0: i32) -> (i32, i32) {
    %c0_i32 = arith.constant 0 : i32
    %c0_i32_0 = arith.constant 0 : i32
    return %c0_i32, %arg0 : i32, i32
  }
  func.func @transform_1(%arg0: i32) -> (i32, i32) {
    %c0_i32 = arith.constant 0 : i32
    %c0_i32_0 = arith.constant 0 : i32
    %c0_i32_1 = arith.constant 0 : i32
    return %c0_i32, %c0_i32_0 : i32, i32
  }
  func.func @transform_2(%arg0: i32) -> (i32, i32) {
    %c0_i32 = arith.constant 0 : i32
    %c0_i32_0 = arith.constant 0 : i32
    %c0_i32_1 = arith.constant 0 : i32
    return %c0_i32, %c0_i32_0 : i32, i32
  }
  func.func @transform_3(%arg0: i32) -> (i32, i32) {
    %c0_i32 = arith.constant 0 : i32
    %c0_i32_0 = arith.constant 0 : i32
    %c0_i32_1 = arith.constant 0 : i32
    return %c0_i32, %c0_i32_0 : i32, i32
  }
  func.func @transform_4(%arg0: i32) -> (i32, i32) {
    %c0_i32 = arith.constant 0 : i32
    %c0_i32_0 = arith.constant 0 : i32
    %c0_i32_1 = arith.constant 0 : i32
    return %c0_i32, %c0_i32_0 : i32, i32
  }
  func.func @transform_5(%arg0: i32) -> (i32, i32) {
    %c0_i32 = arith.constant 0 : i32
    %c0_i32_0 = arith.constant 0 : i32
    %c0_i32_1 = arith.constant 0 : i32
    return %c0_i32, %c0_i32_0 : i32, i32
  }
  func.func @transform_6(%arg0: i32) -> (i32, i32) {
    %c0_i32 = arith.constant 0 : i32
    %c0_i32_0 = arith.constant 0 : i32
    %c0_i32_1 = arith.constant 0 : i32
    return %c0_i32, %c0_i32_0 : i32, i32
  }
  func.func @transform_7(%arg0: i32) -> (i32, i32) {
    %c0_i32 = arith.constant 0 : i32
    %c0_i32_0 = arith.constant 0 : i32
    return %c0_i32, %arg0 : i32, i32
  }
}

</mosaic_0001>

<llo_original>
// kernel: net_forward.1
$region0: #{net_forward.1}
  #allocation0 [shape = 'u32[]', space=smem, size = 0x4, offset = 0x4, fixed_abs, tag = 'smem constant byte address 0x4 - core index']
  #allocation1 [shape = 'u32[144,128]{1,0:T(1,128)}', space=vmem, size = 0x12000, scoped, tag = 'internal scratch']
  %s0 = inlined_call_operand.vmem [shape: f32[8,32], index: 0, kind: input, shape index: {}]
  %s1 = inlined_call_operand.vmem [shape: bf16[256,8], index: 1, kind: input, shape index: {}]
  %s2 = inlined_call_operand.vmem [shape: f32[256,1], index: 2, kind: input, shape index: {}]
  %s3 = inlined_call_operand.vmem [shape: bf16[256,256], index: 3, kind: input, shape index: {}]
  %s4 = inlined_call_operand.vmem [shape: f32[256,1], index: 4, kind: input, shape index: {}]
  %s5 = inlined_call_operand.vmem [shape: bf16[8,256], index: 5, kind: input, shape index: {}]
  %s6 = inlined_call_operand.vmem [shape: f32[8,1], index: 6, kind: input, shape index: {}]
  %s7 = inlined_call_operand.vmem [shape: f32[8,32], index: 7, kind: output, shape index: {}]
  %s8 = sld [smem:[#allocation0]]
  $region38: #{net_forward.1} parent=0
    _
  %s10 = ssub.s32 1, %s8
  %s11 = scalar_select 0, %s10, %s8
  // Predicated region
  $region2: #{net_forward.1} parent=0 // pred_check
    _
  $region3: #{net_forward.1} parent=0 // pred_check_branch
    %13 = sbr.rel (0) target = $region5
  $region4: #{net_forward.1} parent=0 // pred_region
    _
  $region5: #{net_forward.1} parent=0 // pred_fallthru
    _
  // Predicated region
  $region6: #{net_forward.1} parent=0 // pred_check
    _
  $region7: #{net_forward.1} parent=0 // pred_check_branch
    %15 = sbr.rel (0) target = $region9
  $region8: #{net_forward.1} parent=0 // pred_region
    _
  $region9: #{net_forward.1} parent=0 // pred_fallthru
    _
  // Predicated region
  $region10: #{net_forward.1} parent=0 // pred_check
    _
  $region11: #{net_forward.1} parent=0 // pred_check_branch
    %17 = sbr.rel (0) target = $region13
  $region12: #{net_forward.1} parent=0 // pred_region
    _
  $region13: #{net_forward.1} parent=0 // pred_fallthru
    _
  // Predicated region
  $region14: #{net_forward.1} parent=0 // pred_check
    _
  $region15: #{net_forward.1} parent=0 // pred_check_branch
    %19 = sbr.rel (0) target = $region17
  $region16: #{net_forward.1} parent=0 // pred_region
    _
  $region17: #{net_forward.1} parent=0 // pred_fallthru
    _
  // Predicated region
  $region18: #{net_forward.1} parent=0 // pred_check
    _
  $region19: #{net_forward.1} parent=0 // pred_check_branch
    %21 = sbr.rel (0) target = $region21
  $region20: #{net_forward.1} parent=0 // pred_region
    _
  $region21: #{net_forward.1} parent=0 // pred_fallthru
    _
  // Predicated region
  $region22: #{net_forward.1} parent=0 // pred_check
    _
  $region23: #{net_forward.1} parent=0 // pred_check_branch
    %23 = sbr.rel (0) target = $region25
  $region24: #{net_forward.1} parent=0 // pred_region
    _
  $region25: #{net_forward.1} parent=0 // pred_fallthru
    _
  // Predicated region
  $region26: #{net_forward.1} parent=0 // pred_check
    _
  $region27: #{net_forward.1} parent=0 // pred_check_branch
    %25 = sbr.rel (0) target = $region29
  $region28: #{net_forward.1} parent=0 // pred_region
    _
  $region29: #{net_forward.1} parent=0 // pred_fallthru
    _
  %v27 = vld [vmem:[%s0] sm:$0xff]
  %v28 = vpack.c.bf16 %v27, %v27
  %v29 = vld [vmem:[%s1] sm:$0xf]
  %v30 = vld [vmem:[%s1 + $0x4] sm:$0xf]
  %v31 = vld [vmem:[%s1 + $0x8] sm:$0xf]
  %v32 = vld [vmem:[%s1 + $0xc] sm:$0xf]
  %v33 = vld [vmem:[%s1 + $0x10] sm:$0xf]
  %v34 = vld [vmem:[%s1 + $0x14] sm:$0xf]
  %v35 = vld [vmem:[%s1 + $0x18] sm:$0xf]
  %v36 = vld [vmem:[%s1 + $0x1c] sm:$0xf]
  %v37 = vld [vmem:[%s1 + $0x20] sm:$0xf]
  %v38 = vld [vmem:[%s1 + $0x24] sm:$0xf]
  %v39 = vld [vmem:[%s1 + $0x28] sm:$0xf]
  %v40 = vld [vmem:[%s1 + $0x2c] sm:$0xf]
  %v41 = vld [vmem:[%s1 + $0x30] sm:$0xf]
  %v42 = vld [vmem:[%s1 + $0x34] sm:$0xf]
  %v43 = vld [vmem:[%s1 + $0x38] sm:$0xf]
  %v44 = vld [vmem:[%s1 + $0x3c] sm:$0xf]
  %v45 = vld [vmem:[%s1 + $0x40] sm:$0xf]
  %v46 = vld [vmem:[%s1 + $0x44] sm:$0xf]
  %v47 = vld [vmem:[%s1 + $0x48] sm:$0xf]
  %v48 = vld [vmem:[%s1 + $0x4c] sm:$0xf]
  %v49 = vld [vmem:[%s1 + $0x50] sm:$0xf]
  %v50 = vld [vmem:[%s1 + $0x54] sm:$0xf]
  %v51 = vld [vmem:[%s1 + $0x58] sm:$0xf]
  %v52 = vld [vmem:[%s1 + $0x5c] sm:$0xf]
  %v53 = vld [vmem:[%s1 + $0x60] sm:$0xf]
  %v54 = vld [vmem:[%s1 + $0x64] sm:$0xf]
  %v55 = vld [vmem:[%s1 + $0x68] sm:$0xf]
  %v56 = vld [vmem:[%s1 + $0x6c] sm:$0xf]
  %v57 = vld [vmem:[%s1 + $0x70] sm:$0xf]
  %v58 = vld [vmem:[%s1 + $0x74] sm:$0xf]
  %v59 = vld [vmem:[%s1 + $0x78] sm:$0xf]
  %v60 = vld [vmem:[%s1 + $0x7c] sm:$0xf]
  %v61 = vld [vmem:[%s2] sm:$0xff]
  %v62 = vld [vmem:[%s2 + $0x8] sm:$0xff]
  %v63 = vld [vmem:[%s2 + $0x10] sm:$0xff]
  %v64 = vld [vmem:[%s2 + $0x18] sm:$0xff]
  %v65 = vld [vmem:[%s2 + $0x20] sm:$0xff]
  %v66 = vld [vmem:[%s2 + $0x28] sm:$0xff]
  %v67 = vld [vmem:[%s2 + $0x30] sm:$0xff]
  %v68 = vld [vmem:[%s2 + $0x38] sm:$0xff]
  %v69 = vld [vmem:[%s2 + $0x40] sm:$0xff]
  %v70 = vld [vmem:[%s2 + $0x48] sm:$0xff]
  %v71 = vld [vmem:[%s2 + $0x50] sm:$0xff]
  %v72 = vld [vmem:[%s2 + $0x58] sm:$0xff]
  %v73 = vld [vmem:[%s2 + $0x60] sm:$0xff]
  %v74 = vld [vmem:[%s2 + $0x68] sm:$0xff]
  %v75 = vld [vmem:[%s2 + $0x70] sm:$0xff]
  %v76 = vld [vmem:[%s2 + $0x78] sm:$0xff]
  %v77 = vld [vmem:[%s2 + $0x80] sm:$0xff]
  %v78 = vld [vmem:[%s2 + $0x88] sm:$0xff]
  %v79 = vld [vmem:[%s2 + $0x90] sm:$0xff]
  %v80 = vld [vmem:[%s2 + $0x98] sm:$0xff]
  %v81 = vld [vmem:[%s2 + $0xa0] sm:$0xff]
  %v82 = vld [vmem:[%s2 + $0xa8] sm:$0xff]
  %v83 = vld [vmem:[%s2 + $0xb0] sm:$0xff]
  %v84 = vld [vmem:[%s2 + $0xb8] sm:$0xff]
  %v85 = vld [vmem:[%s2 + $0xc0] sm:$0xff]
  %v86 = vld [vmem:[%s2 + $0xc8] sm:$0xff]
  %v87 = vld [vmem:[%s2 + $0xd0] sm:$0xff]
  %v88 = vld [vmem:[%s2 + $0xd8] sm:$0xff]
  %v89 = vld [vmem:[%s2 + $0xe0] sm:$0xff]
  %v90 = vld [vmem:[%s2 + $0xe8] sm:$0xff]
  %v91 = vld [vmem:[%s2 + $0xf0] sm:$0xff]
  %v92 = vld [vmem:[%s2 + $0xf8] sm:$0xff]
  %94 = vset.pattern.permute.xlu0 0
  %95 = vperm.xlu0 %94, %v61
  %v96 = vpop.permute.xlu0 %95
  %99 = vset.pattern.permute.xlu0 0
  %100 = vperm.xlu0 %99, %v62
  %v101 = vpop.permute.xlu0 %100
  %104 = vset.pattern.permute.xlu0 0
  %105 = vperm.xlu0 %104, %v63
  %v106 = vpop.permute.xlu0 %105
  %109 = vset.pattern.permute.xlu0 0
  %110 = vperm.xlu0 %109, %v64
  %v111 = vpop.permute.xlu0 %110
  %114 = vset.pattern.permute.xlu0 0
  %115 = vperm.xlu0 %114, %v65
  %v116 = vpop.permute.xlu0 %115
  %119 = vset.pattern.permute.xlu0 0
  %120 = vperm.xlu0 %119, %v66
  %v121 = vpop.permute.xlu0 %120
  %124 = vset.pattern.permute.xlu0 0
  %125 = vperm.xlu0 %124, %v67
  %v126 = vpop.permute.xlu0 %125
  %129 = vset.pattern.permute.xlu0 0
  %130 = vperm.xlu0 %129, %v68
  %v131 = vpop.permute.xlu0 %130
  %134 = vset.pattern.permute.xlu0 0
  %135 = vperm.xlu0 %134, %v69
  %v136 = vpop.permute.xlu0 %135
  %139 = vset.pattern.permute.xlu0 0
  %140 = vperm.xlu0 %139, %v70
  %v141 = vpop.permute.xlu0 %140
  %144 = vset.pattern.permute.xlu0 0
  %145 = vperm.xlu0 %144, %v71
  %v146 = vpop.permute.xlu0 %145
  %149 = vset.pattern.permute.xlu0 0
  %150 = vperm.xlu0 %149, %v72
  %v151 = vpop.permute.xlu0 %150
  %154 = vset.pattern.permute.xlu0 0
  %155 = vperm.xlu0 %154, %v73
  %v156 = vpop.permute.xlu0 %155
  %159 = vset.pattern.permute.xlu0 0
  %160 = vperm.xlu0 %159, %v74
  %v161 = vpop.permute.xlu0 %160
  %164 = vset.pattern.permute.xlu0 0
  %165 = vperm.xlu0 %164, %v75
  %v166 = vpop.permute.xlu0 %165
  %169 = vset.pattern.permute.xlu0 0
  %170 = vperm.xlu0 %169, %v76
  %v171 = vpop.permute.xlu0 %170
  %174 = vset.pattern.permute.xlu0 0
  %175 = vperm.xlu0 %174, %v77
  %v176 = vpop.permute.xlu0 %175
  %179 = vset.pattern.permute.xlu0 0
  %180 = vperm.xlu0 %179, %v78
  %v181 = vpop.permute.xlu0 %180
  %184 = vset.pattern.permute.xlu0 0
  %185 = vperm.xlu0 %184, %v79
  %v186 = vpop.permute.xlu0 %185
  %189 = vset.pattern.permute.xlu0 0
  %190 = vperm.xlu0 %189, %v80
  %v191 = vpop.permute.xlu0 %190
  %194 = vset.pattern.permute.xlu0 0
  %195 = vperm.xlu0 %194, %v81
  %v196 = vpop.permute.xlu0 %195
  %199 = vset.pattern.permute.xlu0 0
  %200 = vperm.xlu0 %199, %v82
  %v201 = vpop.permute.xlu0 %200
  %204 = vset.pattern.permute.xlu0 0
  %205 = vperm.xlu0 %204, %v83
  %v206 = vpop.permute.xlu0 %205
  %209 = vset.pattern.permute.xlu0 0
  %210 = vperm.xlu0 %209, %v84
  %v211 = vpop.permute.xlu0 %210
  %214 = vset.pattern.permute.xlu0 0
  %215 = vperm.xlu0 %214, %v85
  %v216 = vpop.permute.xlu0 %215
  %219 = vset.pattern.permute.xlu0 0
  %220 = vperm.xlu0 %219, %v86
  %v221 = vpop.permute.xlu0 %220
  %224 = vset.pattern.permute.xlu0 0
  %225 = vperm.xlu0 %224, %v87
  %v226 = vpop.permute.xlu0 %225
  %229 = vset.pattern.permute.xlu0 0
  %230 = vperm.xlu0 %229, %v88
  %v231 = vpop.permute.xlu0 %230
  %234 = vset.pattern.permute.xlu0 0
  %235 = vperm.xlu0 %234, %v89
  %v236 = vpop.permute.xlu0 %235
  %239 = vset.pattern.permute.xlu0 0
  %240 = vperm.xlu0 %239, %v90
  %v241 = vpop.permute.xlu0 %240
  %244 = vset.pattern.permute.xlu0 0
  %245 = vperm.xlu0 %244, %v91
  %v246 = vpop.permute.xlu0 %245
  %249 = vset.pattern.permute.xlu0 0
  %250 = vperm.xlu0 %249, %v92
  %v251 = vpop.permute.xlu0 %250
  %v285 = vunpack.c.l.b16 %v29
  %v286 = vunpack.c.l.b16 %v30
  %v287 = vunpack.c.l.b16 %v31
  %v288 = vunpack.c.l.b16 %v32
  %v289 = vunpack.c.l.b16 %v33
  %v290 = vunpack.c.l.b16 %v34
  %v291 = vunpack.c.l.b16 %v35
  %v292 = vunpack.c.l.b16 %v36
  %v293 = vunpack.c.l.b16 %v37
  %v294 = vunpack.c.l.b16 %v38
  %v295 = vunpack.c.l.b16 %v39
  %v296 = vunpack.c.l.b16 %v40
  %v297 = vunpack.c.l.b16 %v41
  %v298 = vunpack.c.l.b16 %v42
  %v299 = vunpack.c.l.b16 %v43
  %v300 = vunpack.c.l.b16 %v44
  %v301 = vunpack.c.l.b16 %v45
  %v302 = vunpack.c.l.b16 %v46
  %v303 = vunpack.c.l.b16 %v47
  %v304 = vunpack.c.l.b16 %v48
  %v305 = vunpack.c.l.b16 %v49
  %v306 = vunpack.c.l.b16 %v50
  %v307 = vunpack.c.l.b16 %v51
  %v308 = vunpack.c.l.b16 %v52
  %v309 = vunpack.c.l.b16 %v53
  %v310 = vunpack.c.l.b16 %v54
  %v311 = vunpack.c.l.b16 %v55
  %v312 = vunpack.c.l.b16 %v56
  %v313 = vunpack.c.l.b16 %v57
  %v314 = vunpack.c.l.b16 %v58
  %v315 = vunpack.c.l.b16 %v59
  %v316 = vunpack.c.l.b16 %v60
  %v317 = vpack.c.b16 %v286, %v285
  %v318 = vpack.c.b16 %v288, %v287
  %v319 = vpack.c.b16 %v290, %v289
  %v320 = vpack.c.b16 %v292, %v291
  %v321 = vpack.c.b16 %v294, %v293
  %v322 = vpack.c.b16 %v296, %v295
  %v323 = vpack.c.b16 %v298, %v297
  %v324 = vpack.c.b16 %v300, %v299
  %v325 = vpack.c.b16 %v302, %v301
  %v326 = vpack.c.b16 %v304, %v303
  %v327 = vpack.c.b16 %v306, %v305
  %v328 = vpack.c.b16 %v308, %v307
  %v329 = vpack.c.b16 %v310, %v309
  %v330 = vpack.c.b16 %v312, %v311
  %v331 = vpack.c.b16 %v314, %v313
  %v332 = vpack.c.b16 %v316, %v315
  %vm333 = vcmask 64512
  %v335 = vsel %vm333, %v317, 0
  %v338 = vsel %vm333, %v318, 0
  %v341 = vsel %vm333, %v319, 0
  %v344 = vsel %vm333, %v320, 0
  %v347 = vsel %vm333, %v321, 0
  %v350 = vsel %vm333, %v322, 0
  %v353 = vsel %vm333, %v323, 0
  %v356 = vsel %vm333, %v324, 0
  %v359 = vsel %vm333, %v325, 0
  %v362 = vsel %vm333, %v326, 0
  %v365 = vsel %vm333, %v327, 0
  %v368 = vsel %vm333, %v328, 0
  %v371 = vsel %vm333, %v329, 0
  %v374 = vsel %vm333, %v330, 0
  %v377 = vsel %vm333, %v331, 0
  %v380 = vsel %vm333, %v332, 0
  %vm382 = vcmask 1043456
  %v384 = vsel %vm382, %v28, 0
  %386 = vmatprep.subr.bf16.mxu0 0
  %387 = vmatpush1.bf16.msra.mxu0 0
  %388 = vmatprep.subr.bf16.mxu0 0
  %389 = vmatpush1.bf16.msra.mxu0 0
  %390 = vmatprep.subr.bf16.mxu0 0
  %391 = vmatpush1.bf16.msra.mxu0 0
  %392 = vmatprep.subr.bf16.mxu0 0
  %393 = vmatpush1.bf16.msra.mxu0 0
  %394 = vmatprep.subr.bf16.mxu0 0
  %395 = vmatpush1.bf16.msra.mxu0 0
  %396 = vmatprep.subr.bf16.mxu0 0
  %397 = vmatpush1.bf16.msra.mxu0 0
  %398 = vmatprep.subr.bf16.mxu0 0
  %399 = vmatpush1.bf16.msra.mxu0 0
  %400 = vmatprep.subr.bf16.mxu0 0
  %401 = vmatpush1.bf16.msra.mxu0 %v384
  %402 = vmatprep.subr.bf16.mxu0 0
  %403 = vmatpush2.bf16.msra.mxu0 0
  %404 = vmatprep.subr.bf16.mxu0 0
  %405 = vmatpush2.bf16.msra.mxu0 0
  %406 = vmatprep.subr.bf16.mxu0 0
  %407 = vmatpush2.bf16.msra.mxu0 0
  %408 = vmatprep.subr.bf16.mxu0 0
  %409 = vmatpush2.bf16.msra.mxu0 0
  %410 = vmatprep.subr.bf16.mxu0 0
  %411 = vmatpush2.bf16.msra.mxu0 0
  %412 = vmatprep.subr.bf16.mxu0 0
  %413 = vmatpush2.bf16.msra.mxu0 0
  %414 = vmatprep.subr.bf16.mxu0 0
  %415 = vmatpush2.bf16.msra.mxu0 0
  %416 = vmatprep.subr.bf16.mxu0 0
  %417 = vmatpush2.bf16.msra.mxu0 0
  %418 = vmatprep.mubr.bf16.mxu0 0
  %419 = vmatmul.mubr.bf16.gmra.mxu0 %v335
  %v420 = vpop.f32.mrf.mxu0
  %v421 = vadd.f32 %v96, %v420
  %v422 = vpop.f32.mrf.mxu0
  %v423 = vpop.f32.mrf.mxu0
  %v424 = vadd.f32 %v101, %v423
  %v425 = vpop.f32.mrf.mxu0
  %426 = vmatprep.mubr.bf16.mxu0 0
  %427 = vmatmul.mubr.bf16.gmra.mxu0 %v338
  %v428 = vpop.f32.mrf.mxu0
  %v429 = vadd.f32 %v106, %v428
  %v430 = vpop.f32.mrf.mxu0
  %v431 = vpop.f32.mrf.mxu0
  %v432 = vadd.f32 %v111, %v431
  %v433 = vpop.f32.mrf.mxu0
  %434 = vmatprep.mubr.bf16.mxu0 0
  %435 = vmatmul.mubr.bf16.gmra.mxu0 %v341
  %v436 = vpop.f32.mrf.mxu0
  %v437 = vadd.f32 %v116, %v436
  %v438 = vpop.f32.mrf.mxu0
  %v439 = vpop.f32.mrf.mxu0
  %v440 = vadd.f32 %v121, %v439
  %v441 = vpop.f32.mrf.mxu0
  %442 = vmatprep.mubr.bf16.mxu0 0
  %443 = vmatmul.mubr.bf16.gmra.mxu0 %v344
  %v444 = vpop.f32.mrf.mxu0
  %v445 = vadd.f32 %v126, %v444
  %v446 = vpop.f32.mrf.mxu0
  %v447 = vpop.f32.mrf.mxu0
  %v448 = vadd.f32 %v131, %v447
  %v449 = vpop.f32.mrf.mxu0
  %450 = vmatprep.mubr.bf16.mxu0 0
  %451 = vmatmul.mubr.bf16.gmra.mxu0 %v347
  %v452 = vpop.f32.mrf.mxu0
  %v453 = vadd.f32 %v136, %v452
  %v454 = vpop.f32.mrf.mxu0
  %v455 = vpop.f32.mrf.mxu0
  %v456 = vadd.f32 %v141, %v455
  %v457 = vpop.f32.mrf.mxu0
  %458 = vmatprep.mubr.bf16.mxu0 0
  %459 = vmatmul.mubr.bf16.gmra.mxu0 %v350
  %v460 = vpop.f32.mrf.mxu0
  %v461 = vadd.f32 %v146, %v460
  %v462 = vpop.f32.mrf.mxu0
  %v463 = vpop.f32.mrf.mxu0
  %v464 = vadd.f32 %v151, %v463
  %v465 = vpop.f32.mrf.mxu0
  %466 = vmatprep.mubr.bf16.mxu0 0
  %467 = vmatmul.mubr.bf16.gmra.mxu0 %v353
  %v468 = vpop.f32.mrf.mxu0
  %v469 = vadd.f32 %v156, %v468
  %v470 = vpop.f32.mrf.mxu0
  %v471 = vpop.f32.mrf.mxu0
  %v472 = vadd.f32 %v161, %v471
  %v473 = vpop.f32.mrf.mxu0
  %474 = vmatprep.mubr.bf16.mxu0 0
  %475 = vmatmul.mubr.bf16.gmra.mxu0 %v356
  %v476 = vpop.f32.mrf.mxu0
  %v477 = vadd.f32 %v166, %v476
  %v478 = vpop.f32.mrf.mxu0
  %v479 = vpop.f32.mrf.mxu0
  %v480 = vadd.f32 %v171, %v479
  %v481 = vpop.f32.mrf.mxu0
  %482 = vmatprep.mubr.bf16.mxu0 0
  %483 = vmatmul.mubr.bf16.gmra.mxu0 %v359
  %v484 = vpop.f32.mrf.mxu0
  %v485 = vadd.f32 %v176, %v484
  %v486 = vpop.f32.mrf.mxu0
  %v487 = vpop.f32.mrf.mxu0
  %v488 = vadd.f32 %v181, %v487
  %v489 = vpop.f32.mrf.mxu0
  %490 = vmatprep.mubr.bf16.mxu0 0
  %491 = vmatmul.mubr.bf16.gmra.mxu0 %v362
  %v492 = vpop.f32.mrf.mxu0
  %v493 = vadd.f32 %v186, %v492
  %v494 = vpop.f32.mrf.mxu0
  %v495 = vpop.f32.mrf.mxu0
  %v496 = vadd.f32 %v191, %v495
  %v497 = vpop.f32.mrf.mxu0
  %498 = vmatprep.mubr.bf16.mxu0 0
  %499 = vmatmul.mubr.bf16.gmra.mxu0 %v365
  %v500 = vpop.f32.mrf.mxu0
  %v501 = vadd.f32 %v196, %v500
  %v502 = vpop.f32.mrf.mxu0
  %v503 = vpop.f32.mrf.mxu0
  %v504 = vadd.f32 %v201, %v503
  %v505 = vpop.f32.mrf.mxu0
  %506 = vmatprep.mubr.bf16.mxu0 0
  %507 = vmatmul.mubr.bf16.gmra.mxu0 %v368
  %v508 = vpop.f32.mrf.mxu0
  %v509 = vadd.f32 %v206, %v508
  %v510 = vpop.f32.mrf.mxu0
  %v511 = vpop.f32.mrf.mxu0
  %v512 = vadd.f32 %v211, %v511
  %v513 = vpop.f32.mrf.mxu0
  %514 = vmatprep.mubr.bf16.mxu0 0
  %515 = vmatmul.mubr.bf16.gmra.mxu0 %v371
  %v516 = vpop.f32.mrf.mxu0
  %v517 = vadd.f32 %v216, %v516
  %v518 = vpop.f32.mrf.mxu0
  %v519 = vpop.f32.mrf.mxu0
  %v520 = vadd.f32 %v221, %v519
  %v521 = vpop.f32.mrf.mxu0
  %522 = vmatprep.mubr.bf16.mxu0 0
  %523 = vmatmul.mubr.bf16.gmra.mxu0 %v374
  %v524 = vpop.f32.mrf.mxu0
  %v525 = vadd.f32 %v226, %v524
  %v526 = vpop.f32.mrf.mxu0
  %v527 = vpop.f32.mrf.mxu0
  %v528 = vadd.f32 %v231, %v527
  %v529 = vpop.f32.mrf.mxu0
  %530 = vmatprep.mubr.bf16.mxu0 0
  %531 = vmatmul.mubr.bf16.gmra.mxu0 %v377
  %v532 = vpop.f32.mrf.mxu0
  %v533 = vadd.f32 %v236, %v532
  %v534 = vpop.f32.mrf.mxu0
  %v535 = vpop.f32.mrf.mxu0
  %v536 = vadd.f32 %v241, %v535
  %v537 = vpop.f32.mrf.mxu0
  %538 = vmatprep.mubr.bf16.mxu0 0
  %539 = vmatmul.mubr.bf16.gmra.mxu0 %v380
  %v540 = vpop.f32.mrf.mxu0
  %v541 = vadd.f32 %v246, %v540
  %v542 = vpop.f32.mrf.mxu0
  %v543 = vpop.f32.mrf.mxu0
  %v544 = vadd.f32 %v251, %v543
  %v545 = vpop.f32.mrf.mxu0
  %546 = vdwg.mxu0
  %v547 = vmax.f32 %v421, 0.0
  %v548 = vmax.f32 %v424, 0.0
  %v549 = vmax.f32 %v429, 0.0
  %v550 = vmax.f32 %v432, 0.0
  %v551 = vmax.f32 %v437, 0.0
  %v552 = vmax.f32 %v440, 0.0
  %v553 = vmax.f32 %v445, 0.0
  %v554 = vmax.f32 %v448, 0.0
  %v555 = vmax.f32 %v453, 0.0
  %v556 = vmax.f32 %v456, 0.0
  %v557 = vmax.f32 %v461, 0.0
  %v558 = vmax.f32 %v464, 0.0
  %v559 = vmax.f32 %v469, 0.0
  %v560 = vmax.f32 %v472, 0.0
  %v561 = vmax.f32 %v477, 0.0
  %v562 = vmax.f32 %v480, 0.0
  %v563 = vmax.f32 %v485, 0.0
  %v564 = vmax.f32 %v488, 0.0
  %v565 = vmax.f32 %v493, 0.0
  %v566 = vmax.f32 %v496, 0.0
  %v567 = vmax.f32 %v501, 0.0
  %v568 = vmax.f32 %v504, 0.0
  %v569 = vmax.f32 %v509, 0.0
  %v570 = vmax.f32 %v512, 0.0
  %v571 = vmax.f32 %v517, 0.0
  %v572 = vmax.f32 %v520, 0.0
  %v573 = vmax.f32 %v525, 0.0
  %v574 = vmax.f32 %v528, 0.0
  %v575 = vmax.f32 %v533, 0.0
  %v576 = vmax.f32 %v536, 0.0
  %v577 = vmax.f32 %v541, 0.0
  %v578 = vmax.f32 %v544, 0.0
  %v579 = vld [vmem:[%s3] sm:$0xff]
  %v580 = vld [vmem:[%s3 + $0x8] sm:$0xff]
  %v581 = vld [vmem:[%s3 + $0x10] sm:$0xff]
  %v582 = vld [vmem:[%s3 + $0x18] sm:$0xff]
  %v583 = vld [vmem:[%s3 + $0x20] sm:$0xff]
  %v584 = vld [vmem:[%s3 + $0x28] sm:$0xff]
  %v585 = vld [vmem:[%s3 + $0x30] sm:$0xff]
  %v586 = vld [vmem:[%s3 + $0x38] sm:$0xff]
  %v587 = vld [vmem:[%s3 + $0x40] sm:$0xff]
  %v588 = vld [vmem:[%s3 + $0x48] sm:$0xff]
  %v589 = vld [vmem:[%s3 + $0x50] sm:$0xff]
  %v590 = vld [vmem:[%s3 + $0x58] sm:$0xff]
  %v591 = vld [vmem:[%s3 + $0x60] sm:$0xff]
  %v592 = vld [vmem:[%s3 + $0x68] sm:$0xff]
  %v593 = vld [vmem:[%s3 + $0x70] sm:$0xff]
  %v594 = vld [vmem:[%s3 + $0x78] sm:$0xff]
  %v595 = vld [vmem:[%s3 + $0x80] sm:$0xff]
  %v596 = vld [vmem:[%s3 + $0x88] sm:$0xff]
  %v597 = vld [vmem:[%s3 + $0x90] sm:$0xff]
  %v598 = vld [vmem:[%s3 + $0x98] sm:$0xff]
  %v599 = vld [vmem:[%s3 + $0xa0] sm:$0xff]
  %v600 = vld [vmem:[%s3 + $0xa8] sm:$0xff]
  %v601 = vld [vmem:[%s3 + $0xb0] sm:$0xff]
  %v602 = vld [vmem:[%s3 + $0xb8] sm:$0xff]
  %v603 = vld [vmem:[%s3 + $0xc0] sm:$0xff]
  %v604 = vld [vmem:[%s3 + $0xc8] sm:$0xff]
  %v605 = vld [vmem:[%s3 + $0xd0] sm:$0xff]
  %v606 = vld [vmem:[%s3 + $0xd8] sm:$0xff]
  %v607 = vld [vmem:[%s3 + $0xe0] sm:$0xff]
  %v608 = vld [vmem:[%s3 + $0xe8] sm:$0xff]
  %v609 = vld [vmem:[%s3 + $0xf0] sm:$0xff]
  %v610 = vld [vmem:[%s3 + $0xf8] sm:$0xff]
  %v611 = vpack.c.bf16 %v548, %v547
  %v612 = vpack.c.bf16 %v550, %v549
  %v613 = vpack.c.bf16 %v552, %v551
  %v614 = vpack.c.bf16 %v554, %v553
  %v615 = vpack.c.bf16 %v556, %v555
  %v616 = vpack.c.bf16 %v558, %v557
  %v617 = vpack.c.bf16 %v560, %v559
  %v618 = vpack.c.bf16 %v562, %v561
  %v619 = vpack.c.bf16 %v564, %v563
  %v620 = vpack.c.bf16 %v566, %v565
  %v621 = vpack.c.bf16 %v568, %v567
  %v622 = vpack.c.bf16 %v570, %v569
  %v623 = vpack.c.bf16 %v572, %v571
  %v624 = vpack.c.bf16 %v574, %v573
  %v625 = vpack.c.bf16 %v576, %v575
  %v626 = vpack.c.bf16 %v578, %v577
  %v627 = vld [vmem:[%s4] sm:$0xff]
  %v628 = vld [vmem:[%s4 + $0x8] sm:$0xff]
  %v629 = vld [vmem:[%s4 + $0x10] sm:$0xff]
  %v630 = vld [vmem:[%s4 + $0x18] sm:$0xff]
  %v631 = vld [vmem:[%s4 + $0x20] sm:$0xff]
  %v632 = vld [vmem:[%s4 + $0x28] sm:$0xff]
  %v633 = vld [vmem:[%s4 + $0x30] sm:$0xff]
  %v634 = vld [vmem:[%s4 + $0x38] sm:$0xff]
  %v635 = vld [vmem:[%s4 + $0x40] sm:$0xff]
  %v636 = vld [vmem:[%s4 + $0x48] sm:$0xff]
  %v637 = vld [vmem:[%s4 + $0x50] sm:$0xff]
  %v638 = vld [vmem:[%s4 + $0x58] sm:$0xff]
  %v639 = vld [vmem:[%s4 + $0x60] sm:$0xff]
  %v640 = vld [vmem:[%s4 + $0x68] sm:$0xff]
  %v641 = vld [vmem:[%s4 + $0x70] sm:$0xff]
  %v642 = vld [vmem:[%s4 + $0x78] sm:$0xff]
  %v643 = vld [vmem:[%s4 + $0x80] sm:$0xff]
  %v644 = vld [vmem:[%s4 + $0x88] sm:$0xff]
  %v645 = vld [vmem:[%s4 + $0x90] sm:$0xff]
  %v646 = vld [vmem:[%s4 + $0x98] sm:$0xff]
  %v647 = vld [vmem:[%s4 + $0xa0] sm:$0xff]
  %v648 = vld [vmem:[%s4 + $0xa8] sm:$0xff]
  %v649 = vld [vmem:[%s4 + $0xb0] sm:$0xff]
  %v650 = vld [vmem:[%s4 + $0xb8] sm:$0xff]
  %v651 = vld [vmem:[%s4 + $0xc0] sm:$0xff]
  %v652 = vld [vmem:[%s4 + $0xc8] sm:$0xff]
  %v653 = vld [vmem:[%s4 + $0xd0] sm:$0xff]
  %v654 = vld [vmem:[%s4 + $0xd8] sm:$0xff]
  %v655 = vld [vmem:[%s4 + $0xe0] sm:$0xff]
  %v656 = vld [vmem:[%s4 + $0xe8] sm:$0xff]
  %v657 = vld [vmem:[%s4 + $0xf0] sm:$0xff]
  %v658 = vld [vmem:[%s4 + $0xf8] sm:$0xff]
  %660 = vset.pattern.permute.xlu0 0
  %661 = vperm.xlu0 %660, %v627
  %v662 = vpop.permute.xlu0 %661
  %665 = vset.pattern.permute.xlu0 0
  %666 = vperm.xlu0 %665, %v628
  %v667 = vpop.permute.xlu0 %666
  %670 = vset.pattern.permute.xlu0 0
  %671 = vperm.xlu0 %670, %v629
  %v672 = vpop.permute.xlu0 %671
  %675 = vset.pattern.permute.xlu0 0
  %676 = vperm.xlu0 %675, %v630
  %v677 = vpop.permute.xlu0 %676
  %680 = vset.pattern.permute.xlu0 0
  %681 = vperm.xlu0 %680, %v631
  %v682 = vpop.permute.xlu0 %681
  %685 = vset.pattern.permute.xlu0 0
  %686 = vperm.xlu0 %685, %v632
  %v687 = vpop.permute.xlu0 %686
  %690 = vset.pattern.permute.xlu0 0
  %691 = vperm.xlu0 %690, %v633
  %v692 = vpop.permute.xlu0 %691
  %695 = vset.pattern.permute.xlu0 0
  %696 = vperm.xlu0 %695, %v634
  %v697 = vpop.permute.xlu0 %696
  %700 = vset.pattern.permute.xlu0 0
  %701 = vperm.xlu0 %700, %v635
  %v702 = vpop.permute.xlu0 %701
  %705 = vset.pattern.permute.xlu0 0
  %706 = vperm.xlu0 %705, %v636
  %v707 = vpop.permute.xlu0 %706
  %710 = vset.pattern.permute.xlu0 0
  %711 = vperm.xlu0 %710, %v637
  %v712 = vpop.permute.xlu0 %711
  %715 = vset.pattern.permute.xlu0 0
  %716 = vperm.xlu0 %715, %v638
  %v717 = vpop.permute.xlu0 %716
  %720 = vset.pattern.permute.xlu0 0
  %721 = vperm.xlu0 %720, %v639
  %v722 = vpop.permute.xlu0 %721
  %725 = vset.pattern.permute.xlu0 0
  %726 = vperm.xlu0 %725, %v640
  %v727 = vpop.permute.xlu0 %726
  %730 = vset.pattern.permute.xlu0 0
  %731 = vperm.xlu0 %730, %v641
  %v732 = vpop.permute.xlu0 %731
  %735 = vset.pattern.permute.xlu0 0
  %736 = vperm.xlu0 %735, %v642
  %v737 = vpop.permute.xlu0 %736
  %740 = vset.pattern.permute.xlu0 0
  %741 = vperm.xlu0 %740, %v643
  %v742 = vpop.permute.xlu0 %741
  %745 = vset.pattern.permute.xlu0 0
  %746 = vperm.xlu0 %745, %v644
  %v747 = vpop.permute.xlu0 %746
  %750 = vset.pattern.permute.xlu0 0
  %751 = vperm.xlu0 %750, %v645
  %v752 = vpop.permute.xlu0 %751
  %755 = vset.pattern.permute.xlu0 0
  %756 = vperm.xlu0 %755, %v646
  %v757 = vpop.permute.xlu0 %756
  %760 = vset.pattern.permute.xlu0 0
  %761 = vperm.xlu0 %760, %v647
  %v762 = vpop.permute.xlu0 %761
  %765 = vset.pattern.permute.xlu0 0
  %766 = vperm.xlu0 %765, %v648
  %v767 = vpop.permute.xlu0 %766
  %770 = vset.pattern.permute.xlu0 0
  %771 = vperm.xlu0 %770, %v649
  %v772 = vpop.permute.xlu0 %771
  %775 = vset.pattern.permute.xlu0 0
  %776 = vperm.xlu0 %775, %v650
  %v777 = vpop.permute.xlu0 %776
  %780 = vset.pattern.permute.xlu0 0
  %781 = vperm.xlu0 %780, %v651
  %v782 = vpop.permute.xlu0 %781
  %785 = vset.pattern.permute.xlu0 0
  %786 = vperm.xlu0 %785, %v652
  %v787 = vpop.permute.xlu0 %786
  %790 = vset.pattern.permute.xlu0 0
  %791 = vperm.xlu0 %790, %v653
  %v792 = vpop.permute.xlu0 %791
  %795 = vset.pattern.permute.xlu0 0
  %796 = vperm.xlu0 %795, %v654
  %v797 = vpop.permute.xlu0 %796
  %800 = vset.pattern.permute.xlu0 0
  %801 = vperm.xlu0 %800, %v655
  %v802 = vpop.permute.xlu0 %801
  %805 = vset.pattern.permute.xlu0 0
  %806 = vperm.xlu0 %805, %v656
  %v807 = vpop.permute.xlu0 %806
  %810 = vset.pattern.permute.xlu0 0
  %811 = vperm.xlu0 %810, %v657
  %v812 = vpop.permute.xlu0 %811
  %815 = vset.pattern.permute.xlu0 0
  %816 = vperm.xlu0 %815, %v658
  %v817 = vpop.permute.xlu0 %816
  %v851 = vunpack.c.l.b16 %v579
  %v852 = vunpack.c.h.b16 %v579
  %v853 = vunpack.c.l.b16 %v580
  %v854 = vunpack.c.h.b16 %v580
  %v855 = vunpack.c.l.b16 %v581
  %v856 = vunpack.c.h.b16 %v581
  %v857 = vunpack.c.l.b16 %v582
  %v858 = vunpack.c.h.b16 %v582
  %v859 = vunpack.c.l.b16 %v583
  %v860 = vunpack.c.h.b16 %v583
  %v861 = vunpack.c.l.b16 %v584
  %v862 = vunpack.c.h.b16 %v584
  %v863 = vunpack.c.l.b16 %v585
  %v864 = vunpack.c.h.b16 %v585
  %v865 = vunpack.c.l.b16 %v586
  %v866 = vunpack.c.h.b16 %v586
  %v867 = vunpack.c.l.b16 %v587
  %v868 = vunpack.c.h.b16 %v587
  %v869 = vunpack.c.l.b16 %v588
  %v870 = vunpack.c.h.b16 %v588
  %v871 = vunpack.c.l.b16 %v589
  %v872 = vunpack.c.h.b16 %v589
  %v873 = vunpack.c.l.b16 %v590
  %v874 = vunpack.c.h.b16 %v590
  %v875 = vunpack.c.l.b16 %v591
  %v876 = vunpack.c.h.b16 %v591
  %v877 = vunpack.c.l.b16 %v592
  %v878 = vunpack.c.h.b16 %v592
  %v879 = vunpack.c.l.b16 %v593
  %v880 = vunpack.c.h.b16 %v593
  %v881 = vunpack.c.l.b16 %v594
  %v882 = vunpack.c.h.b16 %v594
  %v883 = vunpack.c.l.b16 %v595
  %v884 = vunpack.c.h.b16 %v595
  %v885 = vunpack.c.l.b16 %v596
  %v886 = vunpack.c.h.b16 %v596
  %v887 = vunpack.c.l.b16 %v597
  %v888 = vunpack.c.h.b16 %v597
  %v889 = vunpack.c.l.b16 %v598
  %v890 = vunpack.c.h.b16 %v598
  %v891 = vunpack.c.l.b16 %v599
  %v892 = vunpack.c.h.b16 %v599
  %v893 = vunpack.c.l.b16 %v600
  %v894 = vunpack.c.h.b16 %v600
  %v895 = vunpack.c.l.b16 %v601
  %v896 = vunpack.c.h.b16 %v601
  %v897 = vunpack.c.l.b16 %v602
  %v898 = vunpack.c.h.b16 %v602
  %v899 = vunpack.c.l.b16 %v603
  %v900 = vunpack.c.h.b16 %v603
  %v901 = vunpack.c.l.b16 %v604
  %v902 = vunpack.c.h.b16 %v604
  %v903 = vunpack.c.l.b16 %v605
  %v904 = vunpack.c.h.b16 %v605
  %v905 = vunpack.c.l.b16 %v606
  %v906 = vunpack.c.h.b16 %v606
  %v907 = vunpack.c.l.b16 %v607
  %v908 = vunpack.c.h.b16 %v607
  %v909 = vunpack.c.l.b16 %v608
  %v910 = vunpack.c.h.b16 %v608
  %v911 = vunpack.c.l.b16 %v609
  %v912 = vunpack.c.h.b16 %v609
  %v913 = vunpack.c.l.b16 %v610
  %v914 = vunpack.c.h.b16 %v610
  %v915 = vpack.c.b16 %v853, %v851
  %v916 = vpack.c.b16 %v854, %v852
  %v917 = vpack.c.b16 %v857, %v855
  %v918 = vpack.c.b16 %v858, %v856
  %v919 = vpack.c.b16 %v861, %v859
  %v920 = vpack.c.b16 %v862, %v860
  %v921 = vpack.c.b16 %v865, %v863
  %v922 = vpack.c.b16 %v866, %v864
  %v923 = vpack.c.b16 %v869, %v867
  %v924 = vpack.c.b16 %v870, %v868
  %v925 = vpack.c.b16 %v873, %v871
  %v926 = vpack.c.b16 %v874, %v872
  %v927 = vpack.c.b16 %v877, %v875
  %v928 = vpack.c.b16 %v878, %v876
  %v929 = vpack.c.b16 %v881, %v879
  %v930 = vpack.c.b16 %v882, %v880
  %v931 = vpack.c.b16 %v885, %v883
  %v932 = vpack.c.b16 %v886, %v884
  %v933 = vpack.c.b16 %v889, %v887
  %v934 = vpack.c.b16 %v890, %v888
  %v935 = vpack.c.b16 %v893, %v891
  %v936 = vpack.c.b16 %v894, %v892
  %v937 = vpack.c.b16 %v897, %v895
  %v938 = vpack.c.b16 %v898, %v896
  %v939 = vpack.c.b16 %v901, %v899
  %v940 = vpack.c.b16 %v902, %v900
  %v941 = vpack.c.b16 %v905, %v903
  %v942 = vpack.c.b16 %v906, %v904
  %v943 = vpack.c.b16 %v909, %v907
  %v944 = vpack.c.b16 %v910, %v908
  %v945 = vpack.c.b16 %v913, %v911
  %v946 = vpack.c.b16 %v914, %v912
  %979 = vmatprep.subr.bf16.mxu0 0
  %980 = vmatpush1.bf16.msra.mxu0 %v618
  %981 = vmatprep.subr.bf16.mxu0 0
  %982 = vmatpush1.bf16.msra.mxu0 %v617
  %983 = vmatprep.subr.bf16.mxu0 0
  %984 = vmatpush1.bf16.msra.mxu0 %v616
  %985 = vmatprep.subr.bf16.mxu0 0
  %986 = vmatpush1.bf16.msra.mxu0 %v615
  %987 = vmatprep.subr.bf16.mxu0 0
  %988 = vmatpush1.bf16.msra.mxu0 %v614
  %989 = vmatprep.subr.bf16.mxu0 0
  %990 = vmatpush1.bf16.msra.mxu0 %v613
  %991 = vmatprep.subr.bf16.mxu0 0
  %992 = vmatpush1.bf16.msra.mxu0 %v612
  %993 = vmatprep.subr.bf16.mxu0 0
  %994 = vmatpush1.bf16.msra.mxu0 %v611
  %995 = vmatprep.subr.bf16.mxu0 0
  %996 = vmatpush2.bf16.msra.mxu0 %v626
  %997 = vmatprep.subr.bf16.mxu0 0
  %998 = vmatpush2.bf16.msra.mxu0 %v625
  %999 = vmatprep.subr.bf16.mxu0 0
  %1000 = vmatpush2.bf16.msra.mxu0 %v624
  %1001 = vmatprep.subr.bf16.mxu0 0
  %1002 = vmatpush2.bf16.msra.mxu0 %v623
  %1003 = vmatprep.subr.bf16.mxu0 0
  %1004 = vmatpush2.bf16.msra.mxu0 %v622
  %1005 = vmatprep.subr.bf16.mxu0 0
  %1006 = vmatpush2.bf16.msra.mxu0 %v621
  %1007 = vmatprep.subr.bf16.mxu0 0
  %1008 = vmatpush2.bf16.msra.mxu0 %v620
  %1009 = vmatprep.subr.bf16.mxu0 0
  %1010 = vmatpush2.bf16.msra.mxu0 %v619
  %1011 = vmatprep.mubr.bf16.mxu0 %v916
  %1012 = vmatmul.mubr.bf16.gmra.mxu0 %v915
  %v1013 = vpop.f32.mrf.mxu0
  %v1014 = vadd.f32 %v662, %v1013
  %v1015 = vpop.f32.mrf.mxu0
  %v1016 = vpop.f32.mrf.mxu0
  %v1017 = vadd.f32 %v667, %v1016
  %v1018 = vpop.f32.mrf.mxu0
  %1019 = vmatprep.mubr.bf16.mxu0 %v918
  %1020 = vmatmul.mubr.bf16.gmra.mxu0 %v917
  %v1021 = vpop.f32.mrf.mxu0
  %v1022 = vadd.f32 %v672, %v1021
  %v1023 = vpop.f32.mrf.mxu0
  %v1024 = vpop.f32.mrf.mxu0
  %v1025 = vadd.f32 %v677, %v1024
  %v1026 = vpop.f32.mrf.mxu0
  %1027 = vmatprep.mubr.bf16.mxu0 %v920
  %1028 = vmatmul.mubr.bf16.gmra.mxu0 %v919
  %v1029 = vpop.f32.mrf.mxu0
  %v1030 = vadd.f32 %v682, %v1029
  %v1031 = vpop.f32.mrf.mxu0
  %v1032 = vpop.f32.mrf.mxu0
  %v1033 = vadd.f32 %v687, %v1032
  %v1034 = vpop.f32.mrf.mxu0
  %1035 = vmatprep.mubr.bf16.mxu0 %v922
  %1036 = vmatmul.mubr.bf16.gmra.mxu0 %v921
  %v1037 = vpop.f32.mrf.mxu0
  %v1038 = vadd.f32 %v692, %v1037
  %v1039 = vpop.f32.mrf.mxu0
  %v1040 = vpop.f32.mrf.mxu0
  %v1041 = vadd.f32 %v697, %v1040
  %v1042 = vpop.f32.mrf.mxu0
  %1043 = vmatprep.mubr.bf16.mxu0 %v924
  %1044 = vmatmul.mubr.bf16.gmra.mxu0 %v923
  %v1045 = vpop.f32.mrf.mxu0
  %v1046 = vadd.f32 %v702, %v1045
  %v1047 = vpop.f32.mrf.mxu0
  %v1048 = vpop.f32.mrf.mxu0
  %v1049 = vadd.f32 %v707, %v1048
  %v1050 = vpop.f32.mrf.mxu0
  %1051 = vmatprep.mubr.bf16.mxu0 %v926
  %1052 = vmatmul.mubr.bf16.gmra.mxu0 %v925
  %v1053 = vpop.f32.mrf.mxu0
  %v1054 = vadd.f32 %v712, %v1053
  %v1055 = vpop.f32.mrf.mxu0
  %v1056 = vpop.f32.mrf.mxu0
  %v1057 = vadd.f32 %v717, %v1056
  %v1058 = vpop.f32.mrf.mxu0
  %1059 = vmatprep.mubr.bf16.mxu0 %v928
  %1060 = vmatmul.mubr.bf16.gmra.mxu0 %v927
  %v1061 = vpop.f32.mrf.mxu0
  %v1062 = vadd.f32 %v722, %v1061
  %v1063 = vpop.f32.mrf.mxu0
  %v1064 = vpop.f32.mrf.mxu0
  %v1065 = vadd.f32 %v727, %v1064
  %v1066 = vpop.f32.mrf.mxu0
  %1067 = vmatprep.mubr.bf16.mxu0 %v930
  %1068 = vmatmul.mubr.bf16.gmra.mxu0 %v929
  %v1069 = vpop.f32.mrf.mxu0
  %v1070 = vadd.f32 %v732, %v1069
  %v1071 = vpop.f32.mrf.mxu0
  %v1072 = vpop.f32.mrf.mxu0
  %v1073 = vadd.f32 %v737, %v1072
  %v1074 = vpop.f32.mrf.mxu0
  %1075 = vmatprep.mubr.bf16.mxu0 %v932
  %1076 = vmatmul.mubr.bf16.gmra.mxu0 %v931
  %v1077 = vpop.f32.mrf.mxu0
  %v1078 = vadd.f32 %v742, %v1077
  %v1079 = vpop.f32.mrf.mxu0
  %v1080 = vpop.f32.mrf.mxu0
  %v1081 = vadd.f32 %v747, %v1080
  %v1082 = vpop.f32.mrf.mxu0
  %1083 = vmatprep.mubr.bf16.mxu0 %v934
  %1084 = vmatmul.mubr.bf16.gmra.mxu0 %v933
  %v1085 = vpop.f32.mrf.mxu0
  %v1086 = vadd.f32 %v752, %v1085
  %v1087 = vpop.f32.mrf.mxu0
  %v1088 = vpop.f32.mrf.mxu0
  %v1089 = vadd.f32 %v757, %v1088
  %v1090 = vpop.f32.mrf.mxu0
  %1091 = vmatprep.mubr.bf16.mxu0 %v936
  %1092 = vmatmul.mubr.bf16.gmra.mxu0 %v935
  %v1093 = vpop.f32.mrf.mxu0
  %v1094 = vadd.f32 %v762, %v1093
  %v1095 = vpop.f32.mrf.mxu0
  %v1096 = vpop.f32.mrf.mxu0
  %v1097 = vadd.f32 %v767, %v1096
  %v1098 = vpop.f32.mrf.mxu0
  %1099 = vmatprep.mubr.bf16.mxu0 %v938
  %1100 = vmatmul.mubr.bf16.gmra.mxu0 %v937
  %v1101 = vpop.f32.mrf.mxu0
  %v1102 = vadd.f32 %v772, %v1101
  %v1103 = vpop.f32.mrf.mxu0
  %v1104 = vpop.f32.mrf.mxu0
  %v1105 = vadd.f32 %v777, %v1104
  %v1106 = vpop.f32.mrf.mxu0
  %1107 = vmatprep.mubr.bf16.mxu0 %v940
  %1108 = vmatmul.mubr.bf16.gmra.mxu0 %v939
  %v1109 = vpop.f32.mrf.mxu0
  %v1110 = vadd.f32 %v782, %v1109
  %v1111 = vpop.f32.mrf.mxu0
  %v1112 = vpop.f32.mrf.mxu0
  %v1113 = vadd.f32 %v787, %v1112
  %v1114 = vpop.f32.mrf.mxu0
  %1115 = vmatprep.mubr.bf16.mxu0 %v942
  %1116 = vmatmul.mubr.bf16.gmra.mxu0 %v941
  %v1117 = vpop.f32.mrf.mxu0
  %v1118 = vadd.f32 %v792, %v1117
  %v1119 = vpop.f32.mrf.mxu0
  %v1120 = vpop.f32.mrf.mxu0
  %v1121 = vadd.f32 %v797, %v1120
  %v1122 = vpop.f32.mrf.mxu0
  %1123 = vmatprep.mubr.bf16.mxu0 %v944
  %1124 = vmatmul.mubr.bf16.gmra.mxu0 %v943
  %v1125 = vpop.f32.mrf.mxu0
  %v1126 = vadd.f32 %v802, %v1125
  %v1127 = vpop.f32.mrf.mxu0
  %v1128 = vpop.f32.mrf.mxu0
  %v1129 = vadd.f32 %v807, %v1128
  %v1130 = vpop.f32.mrf.mxu0
  %1131 = vmatprep.mubr.bf16.mxu0 %v946
  %1132 = vmatmul.mubr.bf16.gmra.mxu0 %v945
  %v1133 = vpop.f32.mrf.mxu0
  %v1134 = vadd.f32 %v812, %v1133
  %v1135 = vpop.f32.mrf.mxu0
  %v1136 = vpop.f32.mrf.mxu0
  %v1137 = vadd.f32 %v817, %v1136
  %v1138 = vpop.f32.mrf.mxu0
  %1139 = vdwg.mxu0
  %v1140 = vmax.f32 %v1014, 0.0
  %v1141 = vmax.f32 %v1017, 0.0
  %v1142 = vmax.f32 %v1022, 0.0
  %v1143 = vmax.f32 %v1025, 0.0
  %v1144 = vmax.f32 %v1030, 0.0
  %v1145 = vmax.f32 %v1033, 0.0
  %v1146 = vmax.f32 %v1038, 0.0
  %v1147 = vmax.f32 %v1041, 0.0
  %v1148 = vmax.f32 %v1046, 0.0
  %v1149 = vmax.f32 %v1049, 0.0
  %v1150 = vmax.f32 %v1054, 0.0
  %v1151 = vmax.f32 %v1057, 0.0
  %v1152 = vmax.f32 %v1062, 0.0
  %v1153 = vmax.f32 %v1065, 0.0
  %v1154 = vmax.f32 %v1070, 0.0
  %v1155 = vmax.f32 %v1073, 0.0
  %v1156 = vmax.f32 %v1078, 0.0
  %v1157 = vmax.f32 %v1081, 0.0
  %v1158 = vmax.f32 %v1086, 0.0
  %v1159 = vmax.f32 %v1089, 0.0
  %v1160 = vmax.f32 %v1094, 0.0
  %v1161 = vmax.f32 %v1097, 0.0
  %v1162 = vmax.f32 %v1102, 0.0
  %v1163 = vmax.f32 %v1105, 0.0
  %v1164 = vmax.f32 %v1110, 0.0
  %v1165 = vmax.f32 %v1113, 0.0
  %v1166 = vmax.f32 %v1118, 0.0
  %v1167 = vmax.f32 %v1121, 0.0
  %v1168 = vmax.f32 %v1126, 0.0
  %v1169 = vmax.f32 %v1129, 0.0
  %v1170 = vmax.f32 %v1134, 0.0
  %v1171 = vmax.f32 %v1137, 0.0
  %v1172 = vld [vmem:[%s5] sm:$0xff]
  %v1173 = vpack.c.bf16 %v1141, %v1140
  %v1174 = vpack.c.bf16 %v1143, %v1142
  %v1175 = vpack.c.bf16 %v1145, %v1144
  %v1176 = vpack.c.bf16 %v1147, %v1146
  %v1177 = vpack.c.bf16 %v1149, %v1148
  %v1178 = vpack.c.bf16 %v1151, %v1150
  %v1179 = vpack.c.bf16 %v1153, %v1152
  %v1180 = vpack.c.bf16 %v1155, %v1154
  %v1181 = vpack.c.bf16 %v1157, %v1156
  %v1182 = vpack.c.bf16 %v1159, %v1158
  %v1183 = vpack.c.bf16 %v1161, %v1160
  %v1184 = vpack.c.bf16 %v1163, %v1162
  %v1185 = vpack.c.bf16 %v1165, %v1164
  %v1186 = vpack.c.bf16 %v1167, %v1166
  %v1187 = vpack.c.bf16 %v1169, %v1168
  %v1188 = vpack.c.bf16 %v1171, %v1170
  %v1189 = vld [vmem:[%s6] sm:$0xff]
  %1191 = vset.pattern.permute.xlu0 0
  %1192 = vperm.xlu0 %1191, %v1189
  %v1193 = vpop.permute.xlu0 %1192
  %v1196 = vunpack.c.l.b16 %v1172
  %v1197 = vunpack.c.h.b16 %v1172
  %v1198 = vpack.c.b16 %v1196, %v1196
  %v1199 = vpack.c.b16 %v1197, %v1197
  %1202 = vmatprep.subr.bf16.mxu0 0
  %1203 = vmatpush1.bf16.msra.mxu0 %v1180
  %1204 = vmatprep.subr.bf16.mxu0 0
  %1205 = vmatpush1.bf16.msra.mxu0 %v1179
  %1206 = vmatprep.subr.bf16.mxu0 0
  %1207 = vmatpush1.bf16.msra.mxu0 %v1178
  %1208 = vmatprep.subr.bf16.mxu0 0
  %1209 = vmatpush1.bf16.msra.mxu0 %v1177
  %1210 = vmatprep.subr.bf16.mxu0 0
  %1211 = vmatpush1.bf16.msra.mxu0 %v1176
  %1212 = vmatprep.subr.bf16.mxu0 0
  %1213 = vmatpush1.bf16.msra.mxu0 %v1175
  %1214 = vmatprep.subr.bf16.mxu0 0
  %1215 = vmatpush1.bf16.msra.mxu0 %v1174
  %1216 = vmatprep.subr.bf16.mxu0 0
  %1217 = vmatpush1.bf16.msra.mxu0 %v1173
  %1218 = vmatprep.subr.bf16.mxu0 0
  %1219 = vmatpush2.bf16.msra.mxu0 %v1188
  %1220 = vmatprep.subr.bf16.mxu0 0
  %1221 = vmatpush2.bf16.msra.mxu0 %v1187
  %1222 = vmatprep.subr.bf16.mxu0 0
  %1223 = vmatpush2.bf16.msra.mxu0 %v1186
  %1224 = vmatprep.subr.bf16.mxu0 0
  %1225 = vmatpush2.bf16.msra.mxu0 %v1185
  %1226 = vmatprep.subr.bf16.mxu0 0
  %1227 = vmatpush2.bf16.msra.mxu0 %v1184
  %1228 = vmatprep.subr.bf16.mxu0 0
  %1229 = vmatpush2.bf16.msra.mxu0 %v1183
  %1230 = vmatprep.subr.bf16.mxu0 0
  %1231 = vmatpush2.bf16.msra.mxu0 %v1182
  %1232 = vmatprep.subr.bf16.mxu0 0
  %1233 = vmatpush2.bf16.msra.mxu0 %v1181
  %1234 = vmatprep.mubr.bf16.mxu0 %v1199
  %1235 = vmatmul.mubr.bf16.gmra.mxu0 %v1198
  %v1236 = vpop.f32.mrf.mxu0
  %v1237 = vadd.f32 %v1193, %v1236
  %v1238 = vpop.f32.mrf.mxu0
  %v1239 = vpop.f32.mrf.mxu0
  %v1240 = vpop.f32.mrf.mxu0
  %1241 = vdwg.mxu0
  %vm1242 = vcmask 261120
  %1243 = vst.msk [vmem:[%s7] sm:$0xff] %vm1242, %v1237
  // Predicated region
  $region30: #{net_forward.1} parent=0 // pred_check
    _
  $region31: #{net_forward.1} parent=0 // pred_check_branch
    %1245 = sbr.rel (0) target = $region33
  $region32: #{net_forward.1} parent=0 // pred_region
    _
  $region33: #{net_forward.1} parent=0 // pred_fallthru
    _
  // Predicated region
  $region34: #{net_forward.1} parent=0 // pred_check
    _
  $region35: #{net_forward.1} parent=0 // pred_check_branch
    %1247 = sbr.rel (0) target = $region37
  $region36: #{net_forward.1} parent=0 // pred_region
    _
  $region37: #{net_forward.1} parent=0 // pred_fallthru
    _

</llo_original>
